<compile_context>
chip_gen: v6e
topology: v6e:2x2x1
jax: 0.10.0
libtpu: 0.0.40
codegen_flags: <defaults>
</compile_context>

<pallas_src>
import functools

import jax
import jax.numpy as jnp
from jax.experimental import pallas as pl
from jax.experimental.pallas import tpu as pltpu

_TWO_PI = 6.283185307179586


def _plan_layout(total):
    """Pick a lane-dense 2-D layout and row tiling for `total` elements."""
    lane = 512 if total >= 512 else 128          # lane-dense (multiple of 128)
    rows = pl.cdiv(total, lane)
    tile_rows = 256                              # (256, 512) f32 tile = 512 KiB
    if rows <= tile_rows:
        tile_rows = max(8, pl.cdiv(rows, 8) * 8)  # small inputs: single tile
    n_tiles = pl.cdiv(rows, tile_rows)
    rows_padded = n_tiles * tile_rows
    return lane, tile_rows, n_tiles, rows_padded


def _gaussian_noise_kernel(mean_ref, std_ref, x_ref, u1_ref, u2_ref, o_ref,
                           *, cliping_values):
    """mean/std in SMEM; x/u1/u2/o are VMEM tiles.

    x/o tiles are (TM, L); u1/u2 tiles are (TM//2, L): each uniform pair
    produces two gaussians (cos branch -> top half, sin branch -> bottom half).
    """
    mean = mean_ref[0]                            # hoist scalar SMEM reads
    std = std_ref[0]

    u1 = jnp.float32(1.0) - u1_ref[...]           # [0,1) -> (0,1], log-safe
    u2 = u2_ref[...]

    r = jnp.sqrt(jnp.float32(-2.0) * jnp.log(u1))
    theta = jnp.float32(_TWO_PI) * u2
    z = jnp.concatenate([r * jnp.cos(theta), r * jnp.sin(theta)], axis=0)

    # Single affine on the full tile (one broadcast of mean/std), then one
    # cast so the add/clip run in the image dtype (bf16 stays bf16).
    noise = (z * std + mean).astype(o_ref.dtype)
    y = x_ref[...] + noise

    if cliping_values is not None:
        lo, hi = cliping_values
        y = jnp.clip(y, jnp.asarray(lo, y.dtype), jnp.asarray(hi, y.dtype))

    o_ref[...] = y


def random_gaussian_noise(img, key,
                          mean_bounds=(0.0, 0.0),
                          std_bounds=(0.03, 0.2),
                          cliping_values=None):
    """JAX/Pallas equivalent of RandomGaussianNoise.forward (img is NCHW)."""
    lo_m, hi_m = float(min(mean_bounds)), float(max(mean_bounds))
    lo_s, hi_s = float(min(std_bounds)), float(max(std_bounds))

    k_mean, k_std, k_u1, k_u2 = jax.random.split(key, 4)

    # Scalar uniform draws (glue, matches np.random.uniform in the torch code).
    noise_mean = jax.random.uniform(k_mean, (1,), jnp.float32, lo_m, hi_m)
    noise_std = jax.random.uniform(k_std, (1,), jnp.float32, lo_s, hi_s)

    orig_shape = img.shape
    total = 1
    for d in orig_shape:
        total *= int(d)

    lane, tile_rows, n_tiles, rows_padded = _plan_layout(total)
    pad = rows_padded * lane - total

    # Flatten to a lane-dense 2-D slab (pad tail with zeros; sliced off below).
    flat = img.reshape(total)
    if pad:
        flat = jnp.pad(flat, (0, pad))
    x2d = flat.reshape(rows_padded, lane)

    half = tile_rows // 2
    # One uniform per output element total (Box-Muller uses both branches).
    u1 = jax.random.uniform(k_u1, (rows_padded // 2, lane), jnp.float32)
    u2 = jax.random.uniform(k_u2, (rows_padded // 2, lane), jnp.float32)

    kernel = functools.partial(_gaussian_noise_kernel,
                               cliping_values=cliping_values)

    out2d = pl.pallas_call(
        kernel,
        out_shape=jax.ShapeDtypeStruct((rows_padded, lane), img.dtype),
        grid=(n_tiles,),
        in_specs=[
            pl.BlockSpec(memory_space=pltpu.MemorySpace.SMEM),   # noise_mean
            pl.BlockSpec(memory_space=pltpu.MemorySpace.SMEM),   # noise_std
            pl.BlockSpec((tile_rows, lane), lambda i: (i, 0)),   # img tile
            pl.BlockSpec((half, lane), lambda i: (i, 0)),        # u1 tile
            pl.BlockSpec((half, lane), lambda i: (i, 0)),        # u2 tile
        ],
        out_specs=pl.BlockSpec((tile_rows, lane), lambda i: (i, 0)),
        input_output_aliases={2: 0},   # update the padded image slab in place
        compiler_params=pltpu.CompilerParams(
            dimension_semantics=("parallel",)),
    )(noise_mean, noise_std, x2d, u1, u2)

    return out2d.reshape(-1)[:total].reshape(orig_shape)


if __name__ == "__main__":
    key = jax.random.PRNGKey(0)
    k_img, k_noise = jax.random.split(key)

    # Small NCHW input: batch=2, channels=4, spatial=16x16.
    x = jax.random.normal(k_img, (2, 4, 16, 16), dtype=jnp.float32)

    # Default module config: mean_bounds=(0, 0), std_bounds=(0.03, 0.2), no clip.
    y = random_gaussian_noise(x, k_noise,
                              mean_bounds=(0.0, 0.0),
                              std_bounds=(0.03, 0.2),
                              cliping_values=None)
    y = jax.block_until_ready(y)
    assert y.shape == x.shape and y.dtype == x.dtype

    # Sanity: residual std should lie in a loose band around the std bounds.
    resid_std = float(jnp.std(y - x))
    assert 0.005 < resid_std < 0.5, resid_std

    # Exercise the clipping branch once.
    y_clip = random_gaussian_noise(x, k_noise,
                                   mean_bounds=(0.0, 0.0),
                                   std_bounds=(0.03, 0.2),
                                   cliping_values=(-1.0, 1.0))
    y_clip = jax.block_until_ready(y_clip)
    assert float(jnp.max(y_clip)) <= 1.0 + 1e-6
    assert float(jnp.min(y_clip)) >= -1.0 - 1e-6

    print("KERNEL_OK")
</pallas_src>

<mosaic_0001>
module attributes {stable_mosaic.version = 11 : i64} {
  func.func @_gaussian_noise_kernel(%arg0: i32, %arg1: memref<1xf32, #tpu.memory_space<smem>>, %arg2: memref<1xf32, #tpu.memory_space<smem>>, %arg3: memref<8x512xf32, #tpu.memory_space<vmem>>, %arg4: memref<4x512xf32, #tpu.memory_space<vmem>>, %arg5: memref<4x512xf32, #tpu.memory_space<vmem>>, %arg6: memref<8x512xf32, #tpu.memory_space<vmem>>) attributes {dimension_semantics = [#tpu.dimension_semantics<parallel>], iteration_bounds = array<i64: 1>, scalar_prefetch = 0 : i64, scratch_operands = 0 : i64, tpu.core_type = #tpu.core_type<tc>, window_params = [{transform_indices = @transform_0, window_bounds = array<i64: 1>}, {transform_indices = @transform_1, window_bounds = array<i64: 1>}, {transform_indices = @transform_2, window_bounds = array<i64: 8, 512>}, {transform_indices = @transform_3, window_bounds = array<i64: 4, 512>}, {transform_indices = @transform_4, window_bounds = array<i64: 4, 512>}, {transform_indices = @transform_5, window_bounds = array<i64: 8, 512>}]} {
    %c0 = arith.constant 0 : index
    %0 = memref.load %arg1[%c0] : memref<1xf32, #tpu.memory_space<smem>>
    %c0_0 = arith.constant 0 : index
    %1 = memref.load %arg2[%c0_0] : memref<1xf32, #tpu.memory_space<smem>>
    %c0_1 = arith.constant 0 : index
    %c0_2 = arith.constant 0 : index
    %2 = vector.load %arg4[%c0_1, %c0_2] : memref<4x512xf32, #tpu.memory_space<vmem>>, vector<4x512xf32>
    %cst = arith.constant 1.000000e+00 : f32
    %3 = vector.broadcast %cst : f32 to vector<4x512xf32>
    %4 = arith.subf %3, %2 : vector<4x512xf32>
    %c0_3 = arith.constant 0 : index
    %c0_4 = arith.constant 0 : index
    %5 = vector.load %arg5[%c0_3, %c0_4] : memref<4x512xf32, #tpu.memory_space<vmem>>, vector<4x512xf32>
    %6 = math.log %4 : vector<4x512xf32>
    %cst_5 = arith.constant -2.000000e+00 : f32
    %7 = vector.broadcast %cst_5 : f32 to vector<4x512xf32>
    %8 = arith.mulf %7, %6 : vector<4x512xf32>
    %9 = math.sqrt %8 : vector<4x512xf32>
    %cst_6 = arith.constant 6.28318548 : f32
    %10 = vector.broadcast %cst_6 : f32 to vector<4x512xf32>
    %11 = arith.mulf %10, %5 : vector<4x512xf32>
    %12 = math.cos %11 : vector<4x512xf32>
    %13 = arith.mulf %9, %12 : vector<4x512xf32>
    %14 = math.sin %11 : vector<4x512xf32>
    %15 = arith.mulf %9, %14 : vector<4x512xf32>
    %16 = tpu.concatenate %13, %15 in 0 : vector<4x512xf32>, vector<4x512xf32> -> vector<8x512xf32>
    %17 = vector.broadcast %1 : f32 to vector<8x512xf32>
    %18 = arith.mulf %16, %17 : vector<8x512xf32>
    %19 = vector.broadcast %0 : f32 to vector<8x512xf32>
    %20 = arith.addf %18, %19 : vector<8x512xf32>
    %c0_7 = arith.constant 0 : index
    %c0_8 = arith.constant 0 : index
    %21 = vector.load %arg3[%c0_7, %c0_8] : memref<8x512xf32, #tpu.memory_space<vmem>>, vector<8x512xf32>
    %22 = arith.addf %21, %20 : vector<8x512xf32>
    %c0_9 = arith.constant 0 : index
    %c0_10 = arith.constant 0 : index
    %23 = vector.load %arg6[%c0_9, %c0_10] : memref<8x512xf32, #tpu.memory_space<vmem>>, vector<8x512xf32>
    tpu.vector_store %arg6[%c0_9, %c0_10], %22 {strides = array<i32>} : memref<8x512xf32, #tpu.memory_space<vmem>>, vector<8x512xf32>,
    return
  }
  func.func @transform_0(%arg0: i32) -> i32 {
    %c0_i32 = arith.constant 0 : i32
    %c0_i32_0 = arith.constant 0 : i32
    return %c0_i32 : i32
  }
  func.func @transform_1(%arg0: i32) -> i32 {
    %c0_i32 = arith.constant 0 : i32
    %c0_i32_0 = arith.constant 0 : i32
    return %c0_i32 : i32
  }
  func.func @transform_2(%arg0: i32) -> (i32, i32) {
    %c0_i32 = arith.constant 0 : i32
    %c0_i32_0 = arith.constant 0 : i32
    return %arg0, %c0_i32 : i32, i32
  }
  func.func @transform_3(%arg0: i32) -> (i32, i32) {
    %c0_i32 = arith.constant 0 : i32
    %c0_i32_0 = arith.constant 0 : i32
    return %arg0, %c0_i32 : i32, i32
  }
  func.func @transform_4(%arg0: i32) -> (i32, i32) {
    %c0_i32 = arith.constant 0 : i32
    %c0_i32_0 = arith.constant 0 : i32
    return %arg0, %c0_i32 : i32, i32
  }
  func.func @transform_5(%arg0: i32) -> (i32, i32) {
    %c0_i32 = arith.constant 0 : i32
    %c0_i32_0 = arith.constant 0 : i32
    return %arg0, %c0_i32 : i32, i32
  }
}

</mosaic_0001>

<llo_original>
// kernel: tpu_custom_call.1
$region0: #{tpu_custom_call.1}
  #allocation0 [shape = 'u32[]', space=smem, size = 0x4, offset = 0x4, fixed_abs, tag = 'smem constant byte address 0x4 - core index']
  #allocation1 [shape = 'u32[144,128]{1,0:T(1,128)}', space=vmem, size = 0x12000, scoped, tag = 'internal scratch']
  #allocation2 [shape = 'f32[1]{0:T(128)S(6)}', space=smem, size = 0x200, scoped, tag = 'scoped memory for tpu_custom_call.1']
  #allocation3 [shape = 'f32[1]{0:T(128)S(6)}', space=smem, size = 0x200, scoped, tag = 'scoped memory for tpu_custom_call.1']
  %s0 = inlined_call_operand.<no memory space> [shape: f32[1], index: 0, kind: input, shape index: {}]
  %s1 = inlined_call_operand.<no memory space> [shape: f32[1], index: 1, kind: input, shape index: {}]
  %s2 = inlined_call_operand.hbm [shape: f32[8,512], index: 2, kind: input, shape index: {}, may-alias: {2,5}]
  %s3 = inlined_call_operand.vmem [shape: f32[4,512], index: 3, kind: input, shape index: {}]
  %s4 = inlined_call_operand.vmem [shape: f32[4,512], index: 4, kind: input, shape index: {}]
  %s5 = inlined_call_operand.hbm [shape: f32[8,512], index: 5, kind: output, shape index: {}, may-alias: {2,5}]
  %s6 = sld [smem:[#allocation0]]
  $region34: #{tpu_custom_call.1} parent=0
    _
  %s8 = ssub.s32 1, %s6
  %s9 = scalar_select 0, %s8, %s6
  %10 = sst [smem:[#allocation2]] %s0
  %11 = sst [smem:[#allocation3]] %s1
  $region1: #{tpu_custom_call.1} parent=0
    #allocation4 [shape = 'u8[16384]{0}', space=vmem, size = 0x4000, scoped, tag = 'input window, operand 2, single buffered']
    #allocation5 [shape = 's32[1]{0}', space=sflag, size = 0x4, scoped, tag = 'scoped memory for tpu_custom_call.1']
    #allocation6 [shape = 's32[1]{0}', space=sflag, size = 0x4, scoped, tag = 'scoped memory for tpu_custom_call.1']
    #allocation7 [shape = 'u8[16384]{0}', space=vmem, size = 0x4000, scoped, tag = 'output window, operand 0, single buffered']
    %12 = vsyncpa [#allocation5], 0
    %13 = vsyncpa [#allocation6], 0
    // Predicated region
    $region2: #{tpu_custom_call.1} parent=1 // pred_check
      _
    $region3: #{tpu_custom_call.1} parent=1 // pred_check_branch
      %15 = sbr.rel (0) target = $region5
    $region4: #{tpu_custom_call.1} parent=1 // pred_region
      _
    $region5: #{tpu_custom_call.1} parent=1 // pred_fallthru
      _
    // Predicated region
    $region6: #{tpu_custom_call.1} parent=1 // pred_check
      _
    $region7: #{tpu_custom_call.1} parent=1 // pred_check_branch
      %17 = sbr.rel (0) target = $region9
    $region8: #{tpu_custom_call.1} parent=1 // pred_region
      _
    $region9: #{tpu_custom_call.1} parent=1 // pred_fallthru
      _
    // Predicated region
    $region10: #{tpu_custom_call.1} parent=1 // pred_check
      _
    $region11: #{tpu_custom_call.1} parent=1 // pred_check_branch
      %19 = sbr.rel (0) target = $region13
    $region12: #{tpu_custom_call.1} parent=1 // pred_region
      %s21 = ssub.s32 512, 512
      %22 = vsyncadd [#allocation5], %s21
      %s24 = sshll.u32 [#allocation4], 4
      %s25 = int_to_ptr.vmem [resolvable:$true] %s24
      %27 = dma.hbm_to_vmem [thread:$0]  %s2, 512, %s25, [#allocation5]
    $region13: #{tpu_custom_call.1} parent=1 // pred_fallthru
      _
    // Predicated region
    $region14: #{tpu_custom_call.1} parent=1 // pred_check
      _
    $region15: #{tpu_custom_call.1} parent=1 // pred_check_branch
      %29 = sbr.rel (0) target = $region17
    $region16: #{tpu_custom_call.1} parent=1 // pred_region
      _
    $region17: #{tpu_custom_call.1} parent=1 // pred_fallthru
      _
    // Predicated region
    $region18: #{tpu_custom_call.1} parent=1 // pred_check
      _
    $region19: #{tpu_custom_call.1} parent=1 // pred_check_branch
      %31 = sbr.rel (0) target = $region21
    $region20: #{tpu_custom_call.1} parent=1 // pred_region
      _
    $region21: #{tpu_custom_call.1} parent=1 // pred_fallthru
      _
    // Predicated region
    $region22: #{tpu_custom_call.1} parent=1 // pred_check
      _
    $region23: #{tpu_custom_call.1} parent=1 // pred_check_branch
      %33 = sbr.rel (0) target = $region25
    $region24: #{tpu_custom_call.1} parent=1 // pred_region
      %34 = dma.done [#allocation5], 512
    $region25: #{tpu_custom_call.1} parent=1 // pred_fallthru
      _
    %s35 = sld [smem:[#allocation2]]
    %s36 = sld [smem:[#allocation3]]
    %v37 = vld [vmem:[%s3] sm:$0xff]
    %v38 = vld [vmem:[%s3 + $0x8] sm:$0xff]
    %v39 = vsub.f32 1.0, %v37
    %v40 = vsub.f32 1.0, %v38
    %v41 = vld [vmem:[%s4] sm:$0xff]
    %v42 = vld [vmem:[%s4 + $0x8] sm:$0xff]
    %v43 = vlog2.pop %v39
    %v44 = vmul.f32 %v43, 0.6931472
    %v45 = vlog2.pop %v40
    %v46 = vmul.f32 %v45, 0.6931472
    %v47 = vmul.f32 %v44, -2.0
    %v48 = vmul.f32 %v46, -2.0
    %v49 = vrsqrt.pop %v47
    %v50 = vmul.f32 %v47, %v49
    %vm51 = vcmp.eq.f32.partialorder %v47, inf
    %v52 = vsel %vm51, %v47, %v50
    %vm53 = vcmp.eq.f32.partialorder %v47, 0.0
    %v54 = vand.u32 %v47, 2147483648
    %v55 = vsel %vm53, %v54, %v52
    %v56 = vrsqrt.pop %v48
    %v57 = vmul.f32 %v48, %v56
    %vm58 = vcmp.eq.f32.partialorder %v48, inf
    %v59 = vsel %vm58, %v48, %v57
    %vm60 = vcmp.eq.f32.partialorder %v48, 0.0
    %v61 = vand.u32 %v48, 2147483648
    %v62 = vsel %vm60, %v61, %v59
    %v63 = vmul.f32 %v41, 6.2831855
    %v64 = vmul.f32 %v42, 6.2831855
    %v65 = vand.u32 2147483647, %v63
    %vm66 = vcmp.le.f32.partialorder %v65, 0.7853982
    %vm67 = vcmp.lt.s32.totalorder %v63, 0
    %v68 = vand.u32 %v63, 2139095040
    %v69 = vshrl.u32 %v68, 23
    %v70 = vsub.s32 %v69, 127
    %v71 = vand.u32 2147483647, %v63
    %v72 = vand.u32 %v71, 8388607
    %v73 = vor.u32 %v72, 8388608
    %v74 = vsub.s32 0, %v73
    %v75 = vadd.s32 %v70, 1
    %vm76 = vcmp.gt.s32.totalorder %v75, 0
    %v77 = vsel %vm76, %v75, 0
    %v78 = vshrl.u32 %v77, 5
    %v79 = vand.u32 %v77, 31
    %v80 = vsub.s32 32, %v79
    %v81 = vshrl.u32 683565275, %v80
    %v82 = vshll.u32 683565275, %v79
    %v83 = vshrl.u32 2475754826, %v80
    %v84 = vor.u32 %v82, %v83
    %v85 = vshll.u32 2475754826, %v79
    %v86 = vshrl.u32 2131351028, %v80
    %v87 = vor.u32 %v85, %v86
    %v88 = vshll.u32 2131351028, %v79
    %v89 = vshrl.u32 2102212464, %v80
    %v90 = vor.u32 %v88, %v89
    %v91 = vshll.u32 2102212464, %v79
    %v92 = vshrl.u32 920167782, %v80
    %v93 = vor.u32 %v91, %v92
    %v94 = vshll.u32 920167782, %v79
    %v95 = vshrl.u32 1326507024, %v80
    %v96 = vor.u32 %v94, %v95
    %vm97 = vcmp.lt.s32.totalorder %v78, 1
    %vm98 = vcmp.lt.s32.totalorder %v78, 2
    %vm99 = vcmp.lt.s32.totalorder %v78, 3
    %vm100 = vcmp.lt.s32.totalorder %v78, 4
    %v101 = vsel %vm97, %v81, %v84
    %v102 = vsel %vm100, %v90, 2102212464
    %v103 = vsel %vm99, %v87, %v102
    %v104 = vsel %vm98, %v101, %v103
    %v105 = vsel %vm97, %v84, %v87
    %v106 = vsel %vm100, %v93, 920167782
    %v107 = vsel %vm99, %v90, %v106
    %v108 = vsel %vm98, %v105, %v107
    %v109 = vsel %vm97, %v87, %v90
    %v110 = vsel %vm100, %v96, 1326507024
    %v111 = vsel %vm99, %v93, %v110
    %v112 = vsel %vm98, %v109, %v111
    %v113 = vshll.u32 %v73, 8
    %v114 = vmul.u32.u64.compose %v113, %v112
    %v115 = vextract.low.u32 %v114
    %v116 = vextract.high.u32 %v114
    %v117 = vmul.u32.u64.compose %v113, %v108
    %v118 = vextract.low.u32 %v117
    %v119 = vextract.high.u32 %v117
    %v120 = vmul.u32 %v113, %v104
    %v121 = vadd.s32 %v116, %v118
    %vm122 = vc.u32 %v116, %v118
    %v123 = vadd.s32 %v119, 1
    %v124 = vsel %vm122, %v123, %v119
    %v125 = vadd.s32 %v120, %v124
    %v126 = vadd.s32 %v125, 536870912
    %v127 = vshrl.u32 %v126, 30
    %v128 = vshll.u32 %v127, 30
    %v129 = vsub.s32 %v125, %v128
    %vm130 = vcmp.lt.s32.totalorder %v129, 0
    %v131 = vsub.s32 0, %v129
    %v132 = vsel %vm130, %v131, %v129
    %v133 = vclz %v132
    %v134 = vsub.s32 %v133, 2
    %vm135 = vcmp.gt.s32.totalorder 0, %v134
    %v136 = vsel %vm135, 0, %v134
    %v137 = vsub.s32 32, %v136
    %v138 = vshll.u32 %v129, %v136
    %v139 = vshrl.u32 %v121, %v137
    %v140 = vor.u32 %v138, %v139
    %v141 = vsub.s32 4294967266, %v136
    %v142 = vadd.s32 %v141, 127
    %v143 = vshll.u32 %v142, 23
    %v144 = vor.u32 4788187, %v143
    %v145 = vand.u32 2147483647, %v144
    %v147 = vcvt.s32.f32 %v140
    %v148 = vmul.f32 %v147, %v145
    %v149 = vxor.u32 %v148, 2147483648
    %v150 = vsel %vm67, %v149, %v148
    %v151 = vsub.s32 4, %v127
    %v152 = vsel %vm67, %v151, %v127
    %v153 = vsel %vm66, %v63, %v150
    %v154 = vsel %vm66, 0, %v152
    %v155 = vcosq.f32.pop %v153
    %v156 = vsinq.f32.pop %v153
    %vm157 = vweird.f32 %v63
    %v158 = vand.u32 %v154, 3
    %vm159 = vcmp.lt.s32.totalorder %v158, 2
    %vm160 = vcmp.eq.s32.totalorder %v158, 0
    %v161 = vxor.u32 %v156, 2147483648
    %v162 = vsel %vm160, %v155, %v161
    %vm163 = vcmp.eq.s32.totalorder %v158, 2
    %v164 = vxor.u32 %v155, 2147483648
    %v165 = vsel %vm163, %v164, %v156
    %v166 = vsel %vm159, %v162, %v165
    %v167 = vsel %vm157, nan, %v166
    %v168 = vand.u32 2147483647, %v64
    %vm169 = vcmp.le.f32.partialorder %v168, 0.7853982
    %vm170 = vcmp.lt.s32.totalorder %v64, 0
    %v171 = vand.u32 %v64, 2139095040
    %v172 = vshrl.u32 %v171, 23
    %v173 = vsub.s32 %v172, 127
    %v174 = vand.u32 2147483647, %v64
    %v175 = vand.u32 %v174, 8388607
    %v176 = vor.u32 %v175, 8388608
    %v177 = vsub.s32 0, %v176
    %v178 = vadd.s32 %v173, 1
    %vm179 = vcmp.gt.s32.totalorder %v178, 0
    %v180 = vsel %vm179, %v178, 0
    %v181 = vshrl.u32 %v180, 5
    %v182 = vand.u32 %v180, 31
    %v183 = vsub.s32 32, %v182
    %v184 = vshrl.u32 683565275, %v183
    %v185 = vshll.u32 683565275, %v182
    %v186 = vshrl.u32 2475754826, %v183
    %v187 = vor.u32 %v185, %v186
    %v188 = vshll.u32 2475754826, %v182
    %v189 = vshrl.u32 2131351028, %v183
    %v190 = vor.u32 %v188, %v189
    %v191 = vshll.u32 2131351028, %v182
    %v192 = vshrl.u32 2102212464, %v183
    %v193 = vor.u32 %v191, %v192
    %v194 = vshll.u32 2102212464, %v182
    %v195 = vshrl.u32 920167782, %v183
    %v196 = vor.u32 %v194, %v195
    %v197 = vshll.u32 920167782, %v182
    %v198 = vshrl.u32 1326507024, %v183
    %v199 = vor.u32 %v197, %v198
    %vm200 = vcmp.lt.s32.totalorder %v181, 1
    %vm201 = vcmp.lt.s32.totalorder %v181, 2
    %vm202 = vcmp.lt.s32.totalorder %v181, 3
    %vm203 = vcmp.lt.s32.totalorder %v181, 4
    %v204 = vsel %vm200, %v184, %v187
    %v205 = vsel %vm203, %v193, 2102212464
    %v206 = vsel %vm202, %v190, %v205
    %v207 = vsel %vm201, %v204, %v206
    %v208 = vsel %vm200, %v187, %v190
    %v209 = vsel %vm203, %v196, 920167782
    %v210 = vsel %vm202, %v193, %v209
    %v211 = vsel %vm201, %v208, %v210
    %v212 = vsel %vm200, %v190, %v193
    %v213 = vsel %vm203, %v199, 1326507024
    %v214 = vsel %vm202, %v196, %v213
    %v215 = vsel %vm201, %v212, %v214
    %v216 = vshll.u32 %v176, 8
    %v217 = vmul.u32.u64.compose %v216, %v215
    %v218 = vextract.low.u32 %v217
    %v219 = vextract.high.u32 %v217
    %v220 = vmul.u32.u64.compose %v216, %v211
    %v221 = vextract.low.u32 %v220
    %v222 = vextract.high.u32 %v220
    %v223 = vmul.u32 %v216, %v207
    %v224 = vadd.s32 %v219, %v221
    %vm225 = vc.u32 %v219, %v221
    %v226 = vadd.s32 %v222, 1
    %v227 = vsel %vm225, %v226, %v222
    %v228 = vadd.s32 %v223, %v227
    %v229 = vadd.s32 %v228, 536870912
    %v230 = vshrl.u32 %v229, 30
    %v231 = vshll.u32 %v230, 30
    %v232 = vsub.s32 %v228, %v231
    %vm233 = vcmp.lt.s32.totalorder %v232, 0
    %v234 = vsub.s32 0, %v232
    %v235 = vsel %vm233, %v234, %v232
    %v236 = vclz %v235
    %v237 = vsub.s32 %v236, 2
    %vm238 = vcmp.gt.s32.totalorder 0, %v237
    %v239 = vsel %vm238, 0, %v237
    %v240 = vsub.s32 32, %v239
    %v241 = vshll.u32 %v232, %v239
    %v242 = vshrl.u32 %v224, %v240
    %v243 = vor.u32 %v241, %v242
    %v244 = vsub.s32 4294967266, %v239
    %v245 = vadd.s32 %v244, 127
    %v246 = vshll.u32 %v245, 23
    %v247 = vor.u32 4788187, %v246
    %v248 = vand.u32 2147483647, %v247
    %v250 = vcvt.s32.f32 %v243
    %v251 = vmul.f32 %v250, %v248
    %v252 = vxor.u32 %v251, 2147483648
    %v253 = vsel %vm170, %v252, %v251
    %v254 = vsub.s32 4, %v230
    %v255 = vsel %vm170, %v254, %v230
    %v256 = vsel %vm169, %v64, %v253
    %v257 = vsel %vm169, 0, %v255
    %v258 = vcosq.f32.pop %v256
    %v259 = vsinq.f32.pop %v256
    %vm260 = vweird.f32 %v64
    %v261 = vand.u32 %v257, 3
    %vm262 = vcmp.lt.s32.totalorder %v261, 2
    %vm263 = vcmp.eq.s32.totalorder %v261, 0
    %v264 = vxor.u32 %v259, 2147483648
    %v265 = vsel %vm263, %v258, %v264
    %vm266 = vcmp.eq.s32.totalorder %v261, 2
    %v267 = vxor.u32 %v258, 2147483648
    %v268 = vsel %vm266, %v267, %v259
    %v269 = vsel %vm262, %v265, %v268
    %v270 = vsel %vm260, nan, %v269
    %v271 = vmul.f32 %v55, %v167
    %v272 = vmul.f32 %v62, %v270
    %v273 = vand.u32 2147483647, %v63
    %vm274 = vcmp.le.f32.partialorder %v273, 0.7853982
    %vm275 = vcmp.lt.s32.totalorder %v63, 0
    %v276 = vand.u32 %v63, 2139095040
    %v277 = vshrl.u32 %v276, 23
    %v278 = vsub.s32 %v277, 127
    %v279 = vand.u32 2147483647, %v63
    %v280 = vand.u32 %v279, 8388607
    %v281 = vor.u32 %v280, 8388608
    %v282 = vsub.s32 0, %v281
    %v283 = vadd.s32 %v278, 1
    %vm284 = vcmp.gt.s32.totalorder %v283, 0
    %v285 = vsel %vm284, %v283, 0
    %v286 = vshrl.u32 %v285, 5
    %v287 = vand.u32 %v285, 31
    %v288 = vsub.s32 32, %v287
    %v289 = vshrl.u32 683565275, %v288
    %v290 = vshll.u32 683565275, %v287
    %v291 = vshrl.u32 2475754826, %v288
    %v292 = vor.u32 %v290, %v291
    %v293 = vshll.u32 2475754826, %v287
    %v294 = vshrl.u32 2131351028, %v288
    %v295 = vor.u32 %v293, %v294
    %v296 = vshll.u32 2131351028, %v287
    %v297 = vshrl.u32 2102212464, %v288
    %v298 = vor.u32 %v296, %v297
    %v299 = vshll.u32 2102212464, %v287
    %v300 = vshrl.u32 920167782, %v288
    %v301 = vor.u32 %v299, %v300
    %v302 = vshll.u32 920167782, %v287
    %v303 = vshrl.u32 1326507024, %v288
    %v304 = vor.u32 %v302, %v303
    %vm305 = vcmp.lt.s32.totalorder %v286, 1
    %vm306 = vcmp.lt.s32.totalorder %v286, 2
    %vm307 = vcmp.lt.s32.totalorder %v286, 3
    %vm308 = vcmp.lt.s32.totalorder %v286, 4
    %v309 = vsel %vm305, %v289, %v292
    %v310 = vsel %vm308, %v298, 2102212464
    %v311 = vsel %vm307, %v295, %v310
    %v312 = vsel %vm306, %v309, %v311
    %v313 = vsel %vm305, %v292, %v295
    %v314 = vsel %vm308, %v301, 920167782
    %v315 = vsel %vm307, %v298, %v314
    %v316 = vsel %vm306, %v313, %v315
    %v317 = vsel %vm305, %v295, %v298
    %v318 = vsel %vm308, %v304, 1326507024
    %v319 = vsel %vm307, %v301, %v318
    %v320 = vsel %vm306, %v317, %v319
    %v321 = vshll.u32 %v281, 8
    %v322 = vmul.u32.u64.compose %v321, %v320
    %v323 = vextract.low.u32 %v322
    %v324 = vextract.high.u32 %v322
    %v325 = vmul.u32.u64.compose %v321, %v316
    %v326 = vextract.low.u32 %v325
    %v327 = vextract.high.u32 %v325
    %v328 = vmul.u32 %v321, %v312
    %v329 = vadd.s32 %v324, %v326
    %vm330 = vc.u32 %v324, %v326
    %v331 = vadd.s32 %v327, 1
    %v332 = vsel %vm330, %v331, %v327
    %v333 = vadd.s32 %v328, %v332
    %v334 = vadd.s32 %v333, 536870912
    %v335 = vshrl.u32 %v334, 30
    %v336 = vshll.u32 %v335, 30
    %v337 = vsub.s32 %v333, %v336
    %vm338 = vcmp.lt.s32.totalorder %v337, 0
    %v339 = vsub.s32 0, %v337
    %v340 = vsel %vm338, %v339, %v337
    %v341 = vclz %v340
    %v342 = vsub.s32 %v341, 2
    %vm343 = vcmp.gt.s32.totalorder 0, %v342
    %v344 = vsel %vm343, 0, %v342
    %v345 = vsub.s32 32, %v344
    %v346 = vshll.u32 %v337, %v344
    %v347 = vshrl.u32 %v329, %v345
    %v348 = vor.u32 %v346, %v347
    %v349 = vsub.s32 4294967266, %v344
    %v350 = vadd.s32 %v349, 127
    %v351 = vshll.u32 %v350, 23
    %v352 = vor.u32 4788187, %v351
    %v353 = vand.u32 2147483647, %v352
    %v355 = vcvt.s32.f32 %v348
    %v356 = vmul.f32 %v355, %v353
    %v357 = vxor.u32 %v356, 2147483648
    %v358 = vsel %vm275, %v357, %v356
    %v359 = vsub.s32 4, %v335
    %v360 = vsel %vm275, %v359, %v335
    %v361 = vsel %vm274, %v63, %v358
    %v362 = vsel %vm274, 0, %v360
    %v363 = vcosq.f32.pop %v361
    %v364 = vsinq.f32.pop %v361
    %vm365 = vweird.f32 %v63
    %v366 = vadd.s32 %v362, 3
    %v367 = vand.u32 %v366, 3
    %vm368 = vcmp.lt.s32.totalorder %v367, 2
    %vm369 = vcmp.eq.s32.totalorder %v367, 0
    %v370 = vxor.u32 %v364, 2147483648
    %v371 = vsel %vm369, %v363, %v370
    %vm372 = vcmp.eq.s32.totalorder %v367, 2
    %v373 = vxor.u32 %v363, 2147483648
    %v374 = vsel %vm372, %v373, %v364
    %v375 = vsel %vm368, %v371, %v374
    %v376 = vsel %vm365, nan, %v375
    %v377 = vand.u32 2147483647, %v64
    %vm378 = vcmp.le.f32.partialorder %v377, 0.7853982
    %vm379 = vcmp.lt.s32.totalorder %v64, 0
    %v380 = vand.u32 %v64, 2139095040
    %v381 = vshrl.u32 %v380, 23
    %v382 = vsub.s32 %v381, 127
    %v383 = vand.u32 2147483647, %v64
    %v384 = vand.u32 %v383, 8388607
    %v385 = vor.u32 %v384, 8388608
    %v386 = vsub.s32 0, %v385
    %v387 = vadd.s32 %v382, 1
    %vm388 = vcmp.gt.s32.totalorder %v387, 0
    %v389 = vsel %vm388, %v387, 0
    %v390 = vshrl.u32 %v389, 5
    %v391 = vand.u32 %v389, 31
    %v392 = vsub.s32 32, %v391
    %v393 = vshrl.u32 683565275, %v392
    %v394 = vshll.u32 683565275, %v391
    %v395 = vshrl.u32 2475754826, %v392
    %v396 = vor.u32 %v394, %v395
    %v397 = vshll.u32 2475754826, %v391
    %v398 = vshrl.u32 2131351028, %v392
    %v399 = vor.u32 %v397, %v398
    %v400 = vshll.u32 2131351028, %v391
    %v401 = vshrl.u32 2102212464, %v392
    %v402 = vor.u32 %v400, %v401
    %v403 = vshll.u32 2102212464, %v391
    %v404 = vshrl.u32 920167782, %v392
    %v405 = vor.u32 %v403, %v404
    %v406 = vshll.u32 920167782, %v391
    %v407 = vshrl.u32 1326507024, %v392
    %v408 = vor.u32 %v406, %v407
    %vm409 = vcmp.lt.s32.totalorder %v390, 1
    %vm410 = vcmp.lt.s32.totalorder %v390, 2
    %vm411 = vcmp.lt.s32.totalorder %v390, 3
    %vm412 = vcmp.lt.s32.totalorder %v390, 4
    %v413 = vsel %vm409, %v393, %v396
    %v414 = vsel %vm412, %v402, 2102212464
    %v415 = vsel %vm411, %v399, %v414
    %v416 = vsel %vm410, %v413, %v415
    %v417 = vsel %vm409, %v396, %v399
    %v418 = vsel %vm412, %v405, 920167782
    %v419 = vsel %vm411, %v402, %v418
    %v420 = vsel %vm410, %v417, %v419
    %v421 = vsel %vm409, %v399, %v402
    %v422 = vsel %vm412, %v408, 1326507024
    %v423 = vsel %vm411, %v405, %v422
    %v424 = vsel %vm410, %v421, %v423
    %v425 = vshll.u32 %v385, 8
    %v426 = vmul.u32.u64.compose %v425, %v424
    %v427 = vextract.low.u32 %v426
    %v428 = vextract.high.u32 %v426
    %v429 = vmul.u32.u64.compose %v425, %v420
    %v430 = vextract.low.u32 %v429
    %v431 = vextract.high.u32 %v429
    %v432 = vmul.u32 %v425, %v416
    %v433 = vadd.s32 %v428, %v430
    %vm434 = vc.u32 %v428, %v430
    %v435 = vadd.s32 %v431, 1
    %v436 = vsel %vm434, %v435, %v431
    %v437 = vadd.s32 %v432, %v436
    %v438 = vadd.s32 %v437, 536870912
    %v439 = vshrl.u32 %v438, 30
    %v440 = vshll.u32 %v439, 30
    %v441 = vsub.s32 %v437, %v440
    %vm442 = vcmp.lt.s32.totalorder %v441, 0
    %v443 = vsub.s32 0, %v441
    %v444 = vsel %vm442, %v443, %v441
    %v445 = vclz %v444
    %v446 = vsub.s32 %v445, 2
    %vm447 = vcmp.gt.s32.totalorder 0, %v446
    %v448 = vsel %vm447, 0, %v446
    %v449 = vsub.s32 32, %v448
    %v450 = vshll.u32 %v441, %v448
    %v451 = vshrl.u32 %v433, %v449
    %v452 = vor.u32 %v450, %v451
    %v453 = vsub.s32 4294967266, %v448
    %v454 = vadd.s32 %v453, 127
    %v455 = vshll.u32 %v454, 23
    %v456 = vor.u32 4788187, %v455
    %v457 = vand.u32 2147483647, %v456
    %v459 = vcvt.s32.f32 %v452
    %v460 = vmul.f32 %v459, %v457
    %v461 = vxor.u32 %v460, 2147483648
    %v462 = vsel %vm379, %v461, %v460
    %v463 = vsub.s32 4, %v439
    %v464 = vsel %vm379, %v463, %v439
    %v465 = vsel %vm378, %v64, %v462
    %v466 = vsel %vm378, 0, %v464
    %v467 = vcosq.f32.pop %v465
    %v468 = vsinq.f32.pop %v465
    %vm469 = vweird.f32 %v64
    %v470 = vadd.s32 %v466, 3
    %v471 = vand.u32 %v470, 3
    %vm472 = vcmp.lt.s32.totalorder %v471, 2
    %vm473 = vcmp.eq.s32.totalorder %v471, 0
    %v474 = vxor.u32 %v468, 2147483648
    %v475 = vsel %vm473, %v467, %v474
    %vm476 = vcmp.eq.s32.totalorder %v471, 2
    %v477 = vxor.u32 %v467, 2147483648
    %v478 = vsel %vm476, %v477, %v468
    %v479 = vsel %vm472, %v475, %v478
    %v480 = vsel %vm469, nan, %v479
    %v481 = vmul.f32 %v55, %v376
    %v482 = vmul.f32 %v62, %v480
    %v485 = vcombine.high %v271, %v271
    %v486 = vcombine.high %v272, %v272
    %v491 = vcombine.low %v481, %v481
    %v492 = vcombine.low %v482, %v482
    %vm495 = vcmask 1043456
    %v496 = vsel %vm495, %v271, %v491
    %v497 = vsel %vm495, %v485, %v481
    %v498 = vsel %vm495, %v272, %v492
    %v499 = vsel %vm495, %v486, %v482
    %v500 = vstv %s36
    %v501 = vmul.f32 %v496, %v500
    %v502 = vmul.f32 %v497, %v500
    %v503 = vmul.f32 %v498, %v500
    %v504 = vmul.f32 %v499, %v500
    %v505 = vstv %s35
    %v506 = vadd.f32 %v501, %v505
    %v507 = vadd.f32 %v502, %v505
    %v508 = vadd.f32 %v503, %v505
    %v509 = vadd.f32 %v504, %v505
    %v510 = vld [vmem:[#allocation4] sm:$0xff]
    %v511 = vld [vmem:[#allocation4 + $0x8] sm:$0xff]
    %v512 = vld [vmem:[#allocation4 + $0x10] sm:$0xff]
    %v513 = vld [vmem:[#allocation4 + $0x18] sm:$0xff]
    %v514 = vadd.f32 %v510, %v506
    %v515 = vadd.f32 %v511, %v507
    %v516 = vadd.f32 %v512, %v508
    %v517 = vadd.f32 %v513, %v509
    %518 = vst [vmem:[#allocation7] sm:$0xff] %v514
    %519 = vst [vmem:[#allocation7 + $0x8] sm:$0xff] %v515
    %520 = vst [vmem:[#allocation7 + $0x10] sm:$0xff] %v516
    %521 = vst [vmem:[#allocation7 + $0x18] sm:$0xff] %v517
    // Predicated region
    $region26: #{tpu_custom_call.1} parent=1 // pred_check
      _
    $region27: #{tpu_custom_call.1} parent=1 // pred_check_branch
      %523 = sbr.rel (0) target = $region29
    $region28: #{tpu_custom_call.1} parent=1 // pred_region
      %s525 = ssub.s32 512, 512
      %526 = vsyncadd [#allocation6], %s525
      %s528 = sshll.u32 [#allocation7], 4
      %s529 = int_to_ptr.vmem [resolvable:$true] %s528
      %531 = dma.vmem_to_hbm [thread:$0]  %s529, 512, %s5, [#allocation6]
    $region29: #{tpu_custom_call.1} parent=1 // pred_fallthru
      _
    // Predicated region
    $region30: #{tpu_custom_call.1} parent=1 // pred_check
      _
    $region31: #{tpu_custom_call.1} parent=1 // pred_check_branch
      %533 = sbr.rel (0) target = $region33
    $region32: #{tpu_custom_call.1} parent=1 // pred_region
      %534 = dma.done [#allocation6], 512
    $region33: #{tpu_custom_call.1} parent=1 // pred_fallthru
      _
    %535 = vsyncpa [#allocation5], 1
    %536 = vsyncpa [#allocation6], 1

</llo_original>
